<compile_context>
chip_gen: v7x
topology: tpu7x:2x2x1
jax: 0.10.0
libtpu: 0.0.40
codegen_flags: <defaults>
</compile_context>

<pallas_src>
import functools

import jax
import jax.numpy as jnp
from jax.experimental import pallas as pl
from jax.experimental.pallas import tpu as pltpu


def _muc_kernel(xT_ref, posb_ref, wb_ref, outpr_ref, *, c, n_dims, n_units,
                n_classes):
    """One grid step: a [n_dims, TB] tile of stimuli (batch on the lane axis).

    Ref layouts (n_units here is the 8-padded unit count):
      xT_ref   : [D, TB]        attn-scaled stimuli tile (only per-step DMA)
      posb_ref : [D * U, TB]    attn-scaled positions, lane-pre-broadcast
                                (VMEM-resident; rows d*U:(d+1)*U = dim d)
      wb_ref   : [C * U, TB]    phi- and winning-mask-folded fc1 weights,
                                lane-pre-broadcast (VMEM-resident)
      outpr_ref: [2*C, TB]      rows 0..C-1 = logits, rows C..2C-1 = pr
    """
    xT = xT_ref[...]                                   # [D, TB]

    # r == 1 path, attn folded on the host:
    #   dist[u, b] = sum_d | attn_d*x[b, d] - attn_d*pos[u, d] |
    # Unrolled over the small static feature dim; pure abs/add on [U, TB].
    dist = jnp.abs(xT[0:1, :] - posb_ref[0:n_units, :])
    for d in range(1, n_dims):
        dist = dist + jnp.abs(xT[d:d + 1, :]
                              - posb_ref[d * n_units:(d + 1) * n_units, :])

    act = c * jnp.exp(-c * dist)                       # [U, TB]

    # Readout on VPU + sublane reduce (phi and winning mask already in wb).
    logits = []                                        # each [1, TB]
    for cc in range(n_classes):
        w = wb_ref[cc * n_units:(cc + 1) * n_units, :]     # [U, TB]
        logits.append(jnp.sum(w * act, axis=0, keepdims=True))

    if n_classes == 2:
        # Exact 2-class softmax as a stable logistic of the logit difference.
        z = logits[1] - logits[0]
        e = jnp.exp(-jnp.abs(z))
        inv = 1.0 / (1.0 + e)
        p1 = jnp.where(z >= 0, inv, e * inv)
        p0 = jnp.where(z >= 0, e * inv, inv)
        probs = [p0, p1]
    else:
        # General (exact) softmax fallback.
        m = logits[0]
        for cc in range(1, n_classes):
            m = jnp.maximum(m, logits[cc])
        exps = [jnp.exp(lg - m) for lg in logits]
        denom = exps[0]
        for cc in range(1, n_classes):
            denom = denom + exps[cc]
        inv = 1.0 / denom
        probs = [ex * inv for ex in exps]

    # Merged lane-dense output block (one writeback per grid step).  The block
    # only has 2*C (< 8) sublanes, so these row stores are sublane-masked
    # regardless of how they are grouped.
    for cc in range(n_classes):
        outpr_ref[cc:cc + 1, :] = logits[cc]
        outpr_ref[n_classes + cc:n_classes + cc + 1, :] = probs[cc]


def _pick_batch_tile(b_pad, max_tb=512):
    """Largest tile (multiple of 128, <= max_tb) dividing b_pad, preferring
    >= 2 grid steps so v7x's two TensorCores both get work."""
    n = b_pad // 128
    if n <= 1:
        return 128
    for t in range(min(max_tb // 128, n), 0, -1):
        if n % t == 0 and (n // t) >= 2:
            return 128 * t
    return 128


def multi_unit_cluster_forward(X, units_pos, attn, winning_units, fc1_w,
                               params, *, max_tb=512):
    """Batched forward.  X: [B, n_dims] (or [n_dims]).

    Returns (out, pr), each of shape [B, n_classes].
    """
    # TODO(synk): only the r == 1 distance path is kernelized.
    assert float(params['r']) == 1.0, "r != 1 path of _compute_dist not implemented"

    X = jnp.asarray(X, jnp.float32)
    if X.ndim == 1:
        X = X[None, :]
    B, n_dims = X.shape
    n_units = units_pos.shape[0]
    n_classes = fc1_w.shape[0]

    attn = jnp.asarray(attn, jnp.float32).reshape(n_dims)
    # attn folding below is exact only for non-negative attention weights
    # (true for this model family's init / SUSTAIN-style constraints).
    assert bool(jnp.all(attn >= 0)), "attn folding requires attn >= 0"

    c = float(params['c'])
    phi = float(params['phi'])

    # ---- host-side layout plumbing & algebraic folding (no kernel work) ----
    b_pad = pl.cdiv(B, 128) * 128
    tb = _pick_batch_tile(b_pad, max_tb)
    u_pad = pl.cdiv(n_units, 8) * 8          # keep in-kernel slices 8-aligned

    # attn folded into the stimuli: batch on the lane axis, zero-padded.
    xT = jnp.zeros((n_dims, b_pad), jnp.float32).at[:, :B].set((X * attn[None, :]).T)

    # attn-scaled positions, padded units -> 0, pre-broadcast across lanes.
    pos_scaled = jnp.zeros((u_pad, n_dims), jnp.float32).at[:n_units, :].set(
        units_pos.astype(jnp.float32) * attn[None, :])
    posb = jnp.broadcast_to(pos_scaled.T.reshape(n_dims * u_pad, 1),
                            (n_dims * u_pad, tb))

    # phi and the {0,1} winning mask folded into the readout weight (exact);
    # padded units get weight 0 so they never contribute to the logits.
    w_eff = jnp.zeros((n_classes, u_pad), jnp.float32).at[:, :n_units].set(
        phi * fc1_w.astype(jnp.float32) * winning_units.astype(jnp.float32)[None, :])
    wb = jnp.broadcast_to(w_eff.reshape(n_classes * u_pad, 1),
                          (n_classes * u_pad, tb))

    kernel = functools.partial(_muc_kernel, c=c, n_dims=n_dims,
                               n_units=u_pad, n_classes=n_classes)

    merged = pl.pallas_call(
        kernel,
        out_shape=jax.ShapeDtypeStruct((2 * n_classes, b_pad), jnp.float32),
        grid=(b_pad // tb,),
        in_specs=[
            pl.BlockSpec((n_dims, tb), lambda i: (0, i)),              # xT (per step)
            pl.BlockSpec((n_dims * u_pad, tb), lambda i: (0, 0)),      # posb (resident)
            pl.BlockSpec((n_classes * u_pad, tb), lambda i: (0, 0)),   # wb (resident)
        ],
        out_specs=pl.BlockSpec((2 * n_classes, tb), lambda i: (0, i)),
        compiler_params=pltpu.CompilerParams(
            dimension_semantics=("parallel",)),   # megacore shard on v7x
    )(xT, posb, wb)

    out = merged[:n_classes, :B].T     # [B, C]  (= phi * fc1(units_output))
    pr = merged[n_classes:, :B].T      # [B, C]  (= softmax(out))
    return out, pr


def _reference_forward_batch(X, units_pos, attn, winning_units, fc1_w, params):
    """Pure-JAX batched reference mirroring the PyTorch forward (r == 1)."""
    c = params['c']
    phi = params['phi']
    dim_dist = jnp.abs(X[:, None, :] - units_pos[None, :, :])       # [B, U, D]
    dist = jnp.sum(attn[None, None, :] * dim_dist, axis=2)          # [B, U]
    act = c * jnp.exp(-c * dist)                                    # [B, U]
    units_output = act * winning_units.astype(jnp.float32)[None, :]
    out = phi * jnp.sum(units_output[:, None, :]
                        * fc1_w.astype(jnp.float32)[None, :, :], axis=2)  # [B, C]
    pr = jax.nn.softmax(out, axis=1)
    return out, pr


if __name__ == "__main__":
    n_units = 32
    n_dims = 8
    n_classes = 2
    params = {'r': 1, 'c': 2, 'p': 1, 'phi': 1,
              'lr_attn': 0.25, 'lr_nn': 0.25,
              'lr_clusters': 0.15, 'lr_clusters_group': 0.95, 'k': 0.05}

    key = jax.random.PRNGKey(0)
    k_pos, k_x, k_win, k_w = jax.random.split(key, 4)

    # units_pos ~ U[0,1) like torch.rand([n_units, n_dims])
    units_pos = jax.random.uniform(k_pos, (n_units, n_dims), dtype=jnp.float32)
    # attn = ones / n_dims, renormalized (as in __init__)
    attn = jnp.ones((n_dims,), jnp.float32) / n_dims
    attn = attn / jnp.sum(attn)
    # winning_units: bool mask (zeros in __init__; set a few for a non-trivial pass)
    winning_units = (jax.random.uniform(k_win, (n_units,)) < 0.25)
    # fc1 weight: zeros in __init__; small deterministic values here so the
    # readout / softmax path is exercised.
    fc1_w = 0.1 * jax.random.normal(k_w, (n_classes, n_units), dtype=jnp.float32)

    # batch 200: exercises padding + tb=128 / 2 grid steps
    # batch 1024: exercises the large (tb=512) tile with 2 grid steps
    for batch in (200, 1024):
        X = jax.random.uniform(jax.random.fold_in(k_x, batch),
                               (batch, n_dims), dtype=jnp.float32)

        out, pr = multi_unit_cluster_forward(
            X, units_pos, attn, winning_units, fc1_w, params)
        out = jax.block_until_ready(out)
        pr = jax.block_until_ready(pr)

        ref_out, ref_pr = _reference_forward_batch(
            X, units_pos, attn, winning_units, fc1_w, params)

        assert out.shape == (batch, n_classes) and pr.shape == (batch, n_classes)
        assert jnp.allclose(out, ref_out, atol=1e-5, rtol=1e-5), \
            f"logit mismatch at batch={batch}"
        assert jnp.allclose(pr, ref_pr, atol=1e-5, rtol=1e-5), \
            f"softmax mismatch at batch={batch}"

    print("KERNEL_OK")
</pallas_src>

<mosaic_0001>
module attributes {stable_mosaic.version = 11 : i64} {
  func.func @_muc_kernel(%arg0: i32, %arg1: memref<8x128xf32, #tpu.memory_space<vmem>>, %arg2: memref<256x128xf32, #tpu.memory_space<vmem>>, %arg3: memref<64x128xf32, #tpu.memory_space<vmem>>, %arg4: memref<4x128xf32, #tpu.memory_space<vmem>>) attributes {dimension_semantics = [#tpu.dimension_semantics<parallel>], iteration_bounds = array<i64: 2>, scalar_prefetch = 0 : i64, scratch_operands = 0 : i64, tpu.core_type = #tpu.core_type<tc>, window_params = [{transform_indices = @transform_0, window_bounds = array<i64: 8, 128>}, {pipeline_mode = #tpu.pipeline_mode<synchronous>, transform_indices = @transform_1, window_bounds = array<i64: 256, 128>}, {pipeline_mode = #tpu.pipeline_mode<synchronous>, transform_indices = @transform_2, window_bounds = array<i64: 64, 128>}, {transform_indices = @transform_3, window_bounds = array<i64: 4, 128>}]} {
    %c0 = arith.constant 0 : index
    %c0_0 = arith.constant 0 : index
    %0 = vector.load %arg1[%c0, %c0_0] : memref<8x128xf32, #tpu.memory_space<vmem>>, vector<8x128xf32>
    %1 = vector.extract_strided_slice %0 {offsets = [0, 0], sizes = [1, 128], strides = [1, 1]} : vector<8x128xf32> to vector<1x128xf32>
    %c0_1 = arith.constant 0 : index
    %c0_2 = arith.constant 0 : index
    %2 = vector.load %arg2[%c0_1, %c0_2] : memref<256x128xf32, #tpu.memory_space<vmem>>, vector<32x128xf32>
    %3 = vector.broadcast %1 : vector<1x128xf32> to vector<32x128xf32>
    %4 = arith.subf %3, %2 : vector<32x128xf32>
    %5 = math.absf %4 : vector<32x128xf32>
    %6 = vector.extract_strided_slice %0 {offsets = [1, 0], sizes = [1, 128], strides = [1, 1]} : vector<8x128xf32> to vector<1x128xf32>
    %c32 = arith.constant 32 : index
    %c0_3 = arith.constant 0 : index
    %7 = vector.load %arg2[%c32, %c0_3] : memref<256x128xf32, #tpu.memory_space<vmem>>, vector<32x128xf32>
    %8 = vector.broadcast %6 : vector<1x128xf32> to vector<32x128xf32>
    %9 = arith.subf %8, %7 : vector<32x128xf32>
    %10 = math.absf %9 : vector<32x128xf32>
    %11 = arith.addf %5, %10 : vector<32x128xf32>
    %12 = vector.extract_strided_slice %0 {offsets = [2, 0], sizes = [1, 128], strides = [1, 1]} : vector<8x128xf32> to vector<1x128xf32>
    %c64 = arith.constant 64 : index
    %c0_4 = arith.constant 0 : index
    %13 = vector.load %arg2[%c64, %c0_4] : memref<256x128xf32, #tpu.memory_space<vmem>>, vector<32x128xf32>
    %14 = vector.broadcast %12 : vector<1x128xf32> to vector<32x128xf32>
    %15 = arith.subf %14, %13 : vector<32x128xf32>
    %16 = math.absf %15 : vector<32x128xf32>
    %17 = arith.addf %11, %16 : vector<32x128xf32>
    %18 = vector.extract_strided_slice %0 {offsets = [3, 0], sizes = [1, 128], strides = [1, 1]} : vector<8x128xf32> to vector<1x128xf32>
    %c96 = arith.constant 96 : index
    %c0_5 = arith.constant 0 : index
    %19 = vector.load %arg2[%c96, %c0_5] : memref<256x128xf32, #tpu.memory_space<vmem>>, vector<32x128xf32>
    %20 = vector.broadcast %18 : vector<1x128xf32> to vector<32x128xf32>
    %21 = arith.subf %20, %19 : vector<32x128xf32>
    %22 = math.absf %21 : vector<32x128xf32>
    %23 = arith.addf %17, %22 : vector<32x128xf32>
    %24 = vector.extract_strided_slice %0 {offsets = [4, 0], sizes = [1, 128], strides = [1, 1]} : vector<8x128xf32> to vector<1x128xf32>
    %c128 = arith.constant 128 : index
    %c0_6 = arith.constant 0 : index
    %25 = vector.load %arg2[%c128, %c0_6] : memref<256x128xf32, #tpu.memory_space<vmem>>, vector<32x128xf32>
    %26 = vector.broadcast %24 : vector<1x128xf32> to vector<32x128xf32>
    %27 = arith.subf %26, %25 : vector<32x128xf32>
    %28 = math.absf %27 : vector<32x128xf32>
    %29 = arith.addf %23, %28 : vector<32x128xf32>
    %30 = vector.extract_strided_slice %0 {offsets = [5, 0], sizes = [1, 128], strides = [1, 1]} : vector<8x128xf32> to vector<1x128xf32>
    %c160 = arith.constant 160 : index
    %c0_7 = arith.constant 0 : index
    %31 = vector.load %arg2[%c160, %c0_7] : memref<256x128xf32, #tpu.memory_space<vmem>>, vector<32x128xf32>
    %32 = vector.broadcast %30 : vector<1x128xf32> to vector<32x128xf32>
    %33 = arith.subf %32, %31 : vector<32x128xf32>
    %34 = math.absf %33 : vector<32x128xf32>
    %35 = arith.addf %29, %34 : vector<32x128xf32>
    %36 = vector.extract_strided_slice %0 {offsets = [6, 0], sizes = [1, 128], strides = [1, 1]} : vector<8x128xf32> to vector<1x128xf32>
    %c192 = arith.constant 192 : index
    %c0_8 = arith.constant 0 : index
    %37 = vector.load %arg2[%c192, %c0_8] : memref<256x128xf32, #tpu.memory_space<vmem>>, vector<32x128xf32>
    %38 = vector.broadcast %36 : vector<1x128xf32> to vector<32x128xf32>
    %39 = arith.subf %38, %37 : vector<32x128xf32>
    %40 = math.absf %39 : vector<32x128xf32>
    %41 = arith.addf %35, %40 : vector<32x128xf32>
    %42 = vector.extract_strided_slice %0 {offsets = [7, 0], sizes = [1, 128], strides = [1, 1]} : vector<8x128xf32> to vector<1x128xf32>
    %c224 = arith.constant 224 : index
    %c0_9 = arith.constant 0 : index
    %43 = vector.load %arg2[%c224, %c0_9] : memref<256x128xf32, #tpu.memory_space<vmem>>, vector<32x128xf32>
    %44 = vector.broadcast %42 : vector<1x128xf32> to vector<32x128xf32>
    %45 = arith.subf %44, %43 : vector<32x128xf32>
    %46 = math.absf %45 : vector<32x128xf32>
    %47 = arith.addf %41, %46 : vector<32x128xf32>
    %cst = arith.constant -2.000000e+00 : f32
    %48 = vector.broadcast %cst : f32 to vector<32x128xf32>
    %49 = arith.mulf %48, %47 : vector<32x128xf32>
    %50 = math.exp %49 : vector<32x128xf32>
    %cst_10 = arith.constant 2.000000e+00 : f32
    %51 = vector.broadcast %cst_10 : f32 to vector<32x128xf32>
    %52 = arith.mulf %51, %50 : vector<32x128xf32>
    %c0_11 = arith.constant 0 : index
    %c0_12 = arith.constant 0 : index
    %53 = vector.load %arg3[%c0_11, %c0_12] : memref<64x128xf32, #tpu.memory_space<vmem>>, vector<32x128xf32>
    %54 = arith.mulf %53, %52 : vector<32x128xf32>
    %cst_13 = arith.constant dense<0.000000e+00> : vector<128xf32>
    %55 = vector.multi_reduction <add>, %54, %cst_13 [0] : vector<32x128xf32> to vector<128xf32>
    %56 = vector.shape_cast %55 : vector<128xf32> to vector<1x128xf32>
    %c32_14 = arith.constant 32 : index
    %c0_15 = arith.constant 0 : index
    %57 = vector.load %arg3[%c32_14, %c0_15] : memref<64x128xf32, #tpu.memory_space<vmem>>, vector<32x128xf32>
    %58 = arith.mulf %57, %52 : vector<32x128xf32>
    %cst_16 = arith.constant dense<0.000000e+00> : vector<128xf32>
    %59 = vector.multi_reduction <add>, %58, %cst_16 [0] : vector<32x128xf32> to vector<128xf32>
    %60 = vector.shape_cast %59 : vector<128xf32> to vector<1x128xf32>
    %61 = arith.subf %60, %56 : vector<1x128xf32>
    %62 = math.absf %61 : vector<1x128xf32>
    %cst_17 = arith.constant 0.000000e+00 : f32
    %63 = vector.broadcast %cst_17 : f32 to vector<1x128xf32>
    %64 = arith.subf %63, %62 : vector<1x128xf32>
    %65 = math.exp %64 : vector<1x128xf32>
    %cst_18 = arith.constant 1.000000e+00 : f32
    %66 = vector.broadcast %cst_18 : f32 to vector<1x128xf32>
    %67 = arith.addf %66, %65 : vector<1x128xf32>
    %cst_19 = arith.constant 1.000000e+00 : f32
    %68 = vector.broadcast %cst_19 : f32 to vector<1x128xf32>
    %69 = arith.divf %68, %67 : vector<1x128xf32>
    %cst_20 = arith.constant 0.000000e+00 : f32
    %70 = vector.broadcast %cst_20 : f32 to vector<1x128xf32>
    %71 = arith.cmpf oge, %61, %70 : vector<1x128xf32>
    %72 = arith.mulf %65, %69 : vector<1x128xf32>
    %73 = arith.select %71, %69, %72 : vector<1x128xi1>, vector<1x128xf32>
    %cst_21 = arith.constant 0.000000e+00 : f32
    %74 = vector.broadcast %cst_21 : f32 to vector<1x128xf32>
    %75 = arith.cmpf oge, %61, %74 : vector<1x128xf32>
    %76 = arith.mulf %65, %69 : vector<1x128xf32>
    %77 = arith.select %75, %76, %69 : vector<1x128xi1>, vector<1x128xf32>
    %c0_22 = arith.constant 0 : index
    %c0_23 = arith.constant 0 : index
    %78 = vector.load %arg4[%c0_22, %c0_23] : memref<4x128xf32, #tpu.memory_space<vmem>>, vector<1x128xf32>
    tpu.vector_store %arg4[%c0_22, %c0_23], %56 {strides = array<i32>} : memref<4x128xf32, #tpu.memory_space<vmem>>, vector<1x128xf32>,
    %c2 = arith.constant 2 : index
    %c0_24 = arith.constant 0 : index
    %79 = vector.load %arg4[%c2, %c0_24] : memref<4x128xf32, #tpu.memory_space<vmem>>, vector<1x128xf32>
    tpu.vector_store %arg4[%c2, %c0_24], %77 {strides = array<i32>} : memref<4x128xf32, #tpu.memory_space<vmem>>, vector<1x128xf32>,
    %c1 = arith.constant 1 : index
    %c0_25 = arith.constant 0 : index
    %80 = vector.load %arg4[%c1, %c0_25] : memref<4x128xf32, #tpu.memory_space<vmem>>, vector<1x128xf32>
    tpu.vector_store %arg4[%c1, %c0_25], %60 {strides = array<i32>} : memref<4x128xf32, #tpu.memory_space<vmem>>, vector<1x128xf32>,
    %c3 = arith.constant 3 : index
    %c0_26 = arith.constant 0 : index
    %81 = vector.load %arg4[%c3, %c0_26] : memref<4x128xf32, #tpu.memory_space<vmem>>, vector<1x128xf32>
    tpu.vector_store %arg4[%c3, %c0_26], %73 {strides = array<i32>} : memref<4x128xf32, #tpu.memory_space<vmem>>, vector<1x128xf32>,
    return
  }
  func.func @transform_0(%arg0: i32) -> (i32, i32) {
    %c0_i32 = arith.constant 0 : i32
    %c0_i32_0 = arith.constant 0 : i32
    return %c0_i32, %arg0 : i32, i32
  }
  func.func @transform_1(%arg0: i32) -> (i32, i32) {
    %c0_i32 = arith.constant 0 : i32
    %c0_i32_0 = arith.constant 0 : i32
    %c0_i32_1 = arith.constant 0 : i32
    return %c0_i32, %c0_i32_0 : i32, i32
  }
  func.func @transform_2(%arg0: i32) -> (i32, i32) {
    %c0_i32 = arith.constant 0 : i32
    %c0_i32_0 = arith.constant 0 : i32
    %c0_i32_1 = arith.constant 0 : i32
    return %c0_i32, %c0_i32_0 : i32, i32
  }
  func.func @transform_3(%arg0: i32) -> (i32, i32) {
    %c0_i32 = arith.constant 0 : i32
    %c0_i32_0 = arith.constant 0 : i32
    return %c0_i32, %arg0 : i32, i32
  }
}

</mosaic_0001>

<llo_original>
// kernel: tpu_custom_call.1
$region0: #{tpu_custom_call.1}
  #allocation0 [shape = 'u32[]', space=smem, size = 0x4, offset = 0x4, fixed_abs, tag = 'smem constant byte address 0x4 - core index']
  #allocation1 [shape = 'u32[144,128]{1,0:T(1,128)}', space=vmem, size = 0x12000, scoped, tag = 'internal scratch']
  %s0 = inlined_call_operand.hbm [shape: f32[8,256], index: 0, kind: input, shape index: {}]
  %s1 = inlined_call_operand.hbm [shape: f32[256,128], index: 1, kind: input, shape index: {}]
  %s2 = inlined_call_operand.hbm [shape: f32[64,128], index: 2, kind: input, shape index: {}]
  %s3 = inlined_call_operand.hbm [shape: f32[4,256], index: 3, kind: output, shape index: {}]
  %s4 = sld [smem:[#allocation0]]
  $region57: #{tpu_custom_call.1} parent=0
    _
  %s6 = ssub.s32 1, %s4
  %s7 = scalar_select 0, %s6, %s4
  $region1: #{tpu_custom_call.1} parent=0
    #allocation2 [shape = 'u8[8192]{0}', space=vmem, size = 0x2000, scoped, tag = 'input window, operand 0']
    #allocation3 [shape = 's32[2]{0}', space=sflag, size = 0x8, scoped, tag = 'scoped memory for tpu_custom_call.1']
    #allocation4 [shape = 's32[2]{0}', space=sflag, size = 0x8, scoped, tag = 'scoped memory for tpu_custom_call.1']
    #allocation5 [shape = 'u8[131072]{0}', space=vmem, size = 0x20000, scoped, tag = 'input window, operand 1, single buffered']
    #allocation6 [shape = 's32[1]{0}', space=sflag, size = 0x4, scoped, tag = 'scoped memory for tpu_custom_call.1']
    #allocation7 [shape = 'u8[32768]{0}', space=vmem, size = 0x8000, scoped, tag = 'input window, operand 2, single buffered']
    #allocation8 [shape = 'u8[4096]{0}', space=vmem, size = 0x1000, scoped, tag = 'output window, operand 0']
    %8 = vsyncpa [#allocation3], 0
    %s9 = scalar_lea.sflag [#allocation3], 1
    %10 = vsyncpa %s9, 0
    %11 = vsyncpa [#allocation6], 0
    %12 = vsyncpa [#allocation4], 0
    %s13 = scalar_lea.sflag [#allocation4], 1
    %14 = vsyncpa %s13, 0
    loop: start=0, step=1, limit=4
    $region2: #{tpu_custom_call.1} parent=1 // loop_pre_header
      _
    $region3: #{tpu_custom_call.1} parent=1 // loop_header
      %s16 = sphi 0, %s20
      %p17 = scmp.ge.s32.totalorder %s16, 4
      %s26 = sphi 0, %s28
      %s29 = sphi 0, %s26
      %s30 = sphi 0, %s29
      %s46 = sphi 0, %s30
      %s50 = sphi 0, %s50
      %s52 = sphi 0, %s50
      %s53 = sphi 0, %s52
      %s67 = sphi 0, %s53
      %s71 = sphi 0, %s71
      %s73 = sphi 0, %s71
      %s74 = sphi 0, %s73
      %s88 = sphi 0, %s74
      %s94 = sphi 0, %s96
      %s97 = sphi 0, %s94
      %s98 = sphi 0, %s97
      %s114 = sphi 0, %s98
    $region4: #{tpu_custom_call.1} parent=1 // loop_header_branch
      %19 = sbr.rel (%p17) target = $region8
    $region5: #{tpu_custom_call.1} parent=1 // loop_body
      %s21 = ssub.s32 %s16, 1
      %s22 = ssub.s32 %s16, 2
      %s23 = sadd.s32 %s16, 1
      %s24 = ssub.s32 %s16, %s23
      %p25 = scmp.eq.s32.totalorder %s24, 0
      %s27 = sadd.s32 %s26, 1
      %s28 = scalar_select %p25, %s26, %s27
      %p31 = pneg %p25
      %p32 = scmp.eq.s32.totalorder %s16, 1
      %p33 = por %p31, %p32
      %p34 = scmp.ne.s32.totalorder %s26, %s29
      %p35 = scmp.eq.s32.totalorder %s16, 0
      %p36 = por %p34, %p35
      %p37 = scmp.ne.s32.totalorder %s26, %s29
      %p38 = scmp.eq.s32.totalorder %s21, 1
      %p39 = por %p37, %p38
      %p40 = scmp.ne.s32.totalorder %s29, %s30
      %p41 = scmp.eq.s32.totalorder %s21, 0
      %p42 = por %p40, %p41
      %p43 = scmp.ne.s32.totalorder %s29, %s30
      %p44 = scmp.eq.s32.totalorder %s22, 1
      %p45 = por %p43, %p44
      %p47 = scmp.ne.s32.totalorder %s30, %s46
      %p48 = scmp.eq.s32.totalorder %s22, 0
      %p49 = por %p47, %p48
      %s51 = sadd.s32 %s50, 1
      %p54 = scmp.eq.s32.totalorder %s16, 1
      %p55 = scmp.ne.s32.totalorder %s50, %s52
      %p56 = scmp.eq.s32.totalorder %s16, 0
      %p57 = por %p55, %p56
      %p58 = scmp.ne.s32.totalorder %s50, %s52
      %p59 = scmp.eq.s32.totalorder %s21, 1
      %p60 = por %p58, %p59
      %p61 = scmp.ne.s32.totalorder %s52, %s53
      %p62 = scmp.eq.s32.totalorder %s21, 0
      %p63 = por %p61, %p62
      %p64 = scmp.ne.s32.totalorder %s52, %s53
      %p65 = scmp.eq.s32.totalorder %s22, 1
      %p66 = por %p64, %p65
      %p68 = scmp.ne.s32.totalorder %s53, %s67
      %p69 = scmp.eq.s32.totalorder %s22, 0
      %p70 = por %p68, %p69
      %s72 = sadd.s32 %s71, 1
      %p75 = scmp.eq.s32.totalorder %s16, 1
      %p76 = scmp.ne.s32.totalorder %s71, %s73
      %p77 = scmp.eq.s32.totalorder %s16, 0
      %p78 = por %p76, %p77
      %p79 = scmp.ne.s32.totalorder %s71, %s73
      %p80 = scmp.eq.s32.totalorder %s21, 1
      %p81 = por %p79, %p80
      %p82 = scmp.ne.s32.totalorder %s73, %s74
      %p83 = scmp.eq.s32.totalorder %s21, 0
      %p84 = por %p82, %p83
      %p85 = scmp.ne.s32.totalorder %s73, %s74
      %p86 = scmp.eq.s32.totalorder %s22, 1
      %p87 = por %p85, %p86
      %p89 = scmp.ne.s32.totalorder %s74, %s88
      %p90 = scmp.eq.s32.totalorder %s22, 0
      %p91 = por %p89, %p90
      %s92 = ssub.s32 %s16, %s23
      %p93 = scmp.eq.s32.totalorder %s92, 0
      %s95 = sadd.s32 %s94, 1
      %s96 = scalar_select %p93, %s94, %s95
      %p99 = pneg %p93
      %p100 = scmp.eq.s32.totalorder %s16, 1
      %p101 = por %p99, %p100
      %p102 = scmp.ne.s32.totalorder %s94, %s97
      %p103 = scmp.eq.s32.totalorder %s16, 0
      %p104 = por %p102, %p103
      %p105 = scmp.ne.s32.totalorder %s94, %s97
      %p106 = scmp.eq.s32.totalorder %s21, 1
      %p107 = por %p105, %p106
      %p108 = scmp.ne.s32.totalorder %s97, %s98
      %p109 = scmp.eq.s32.totalorder %s21, 0
      %p110 = por %p108, %p109
      %p111 = scmp.ne.s32.totalorder %s97, %s98
      %p112 = scmp.eq.s32.totalorder %s22, 1
      %p113 = por %p111, %p112
      %p115 = scmp.ne.s32.totalorder %s98, %s114
      %p116 = scmp.eq.s32.totalorder %s22, 0
      %p117 = por %p115, %p116
      %p118 = scmp.le.s32.totalorder 1, %s16
      %p119 = scmp.lt.s32.totalorder %s16, 3
      %p120 = pnand %p118, %p119
      %p121 = pneg %p120
      // Predicated region
      $region9: #{tpu_custom_call.1} parent=5 // pred_check
        _
      $region10: #{tpu_custom_call.1} parent=5 // pred_check_branch
        %123 = sbr.rel (%p120) target = $region12
      $region11: #{tpu_custom_call.1} parent=5 // pred_region
        %s124 = ssub.s32 %s16, 1
        // Predicated region
        $region13: #{tpu_custom_call.1} parent=11 // pred_check
          %p125 = pneg %p63
        $region14: #{tpu_custom_call.1} parent=11 // pred_check_branch
          %127 = sbr.rel (%p125) target = $region16
        $region15: #{tpu_custom_call.1} parent=11 // pred_region
          %s129 = ssub.s32 4096, 4096
          %130 = vsyncadd [#allocation6], %s129
          %s131 = sshll.u32 [#allocation5], 4
          %s132 = int_to_ptr.vmem [resolvable:$true] %s131
          %137 = dma.hbm_to_vmem [thread:$0]  %s1, 4096, %s132, [#allocation6], 128, 128, 8
        $region16: #{tpu_custom_call.1} parent=11 // pred_fallthru
          _
        // Predicated region
        $region17: #{tpu_custom_call.1} parent=11 // pred_check
          %p138 = pneg %p84
        $region18: #{tpu_custom_call.1} parent=11 // pred_check_branch
          %140 = sbr.rel (%p138) target = $region20
        $region19: #{tpu_custom_call.1} parent=11 // pred_region
          %s142 = ssub.s32 1024, 1024
          %143 = vsyncadd [#allocation6], %s142
          %s144 = sshll.u32 [#allocation7], 4
          %s145 = int_to_ptr.vmem [resolvable:$true] %s144
          %150 = dma.hbm_to_vmem [thread:$0]  %s2, 1024, %s145, [#allocation6], 128, 128, 8
        $region20: #{tpu_custom_call.1} parent=11 // pred_fallthru
          _
      $region12: #{tpu_custom_call.1} parent=5 // pred_fallthru
        _
      %p151 = scmp.lt.s32.totalorder %s16, 2
      // Predicated region
      $region21: #{tpu_custom_call.1} parent=5 // pred_check
        %p152 = pneg %p151
      $region22: #{tpu_custom_call.1} parent=5 // pred_check_branch
        %154 = sbr.rel (%p152) target = $region24
      $region23: #{tpu_custom_call.1} parent=5 // pred_region
        // Predicated region
        $region25: #{tpu_custom_call.1} parent=23 // pred_check
          %p155 = pneg %p36
        $region26: #{tpu_custom_call.1} parent=23 // pred_check_branch
          %157 = sbr.rel (%p155) target = $region28
        $region27: #{tpu_custom_call.1} parent=23 // pred_region
          %s158 = sand.u32 %s26, 1
          %s159 = scalar_lea.sflag [#allocation3], %s158
          %s160 = sand.u32 %s26, 1
          %s161 = smul.addr %s160, 8
          %s162 = scalar_lea.vmem [#allocation2], %s161
          %s164 = ssub.s32 128, 128
          %165 = vsyncadd %s159, %s164
          %s166 = smul.addr %s16, 128
          %s167 = scalar_lea.hbm %s0, %s166
          %s169 = sshll.u32 %s162, 4
          %s170 = int_to_ptr.vmem [resolvable:$true] %s169
          %172 = dma.hbm_to_vmem [thread:$0]  %s167, 128, %s170, %s159
        $region28: #{tpu_custom_call.1} parent=23 // pred_fallthru
          _
      $region24: #{tpu_custom_call.1} parent=5 // pred_fallthru
        _
      %p173 = scmp.le.s32.totalorder 1, %s16
      %p174 = scmp.lt.s32.totalorder %s16, 3
      %p175 = pnand %p173, %p174
      %p176 = pneg %p175
      // Predicated region
      $region29: #{tpu_custom_call.1} parent=5 // pred_check
        _
      $region30: #{tpu_custom_call.1} parent=5 // pred_check_branch
        %178 = sbr.rel (%p175) target = $region32
      $region31: #{tpu_custom_call.1} parent=5 // pred_region
        %s179 = ssub.s32 %s16, 1
        %s180 = sand.u32 %s29, 1
        %s181 = scalar_lea.sflag [#allocation3], %s180
        %s182 = sand.u32 %s29, 1
        %s183 = smul.addr %s182, 8
        %s184 = scalar_lea.vmem [#allocation2], %s183
        // Predicated region
        $region33: #{tpu_custom_call.1} parent=31 // pred_check
          %p185 = pneg %p42
        $region34: #{tpu_custom_call.1} parent=31 // pred_check_branch
          %187 = sbr.rel (%p185) target = $region36
        $region35: #{tpu_custom_call.1} parent=31 // pred_region
          %188 = dma.done %s181, 128
        $region36: #{tpu_custom_call.1} parent=31 // pred_fallthru
          _
        // Predicated region
        $region37: #{tpu_custom_call.1} parent=31 // pred_check
          %p189 = pneg %p63
        $region38: #{tpu_custom_call.1} parent=31 // pred_check_branch
          %191 = sbr.rel (%p189) target = $region40
        $region39: #{tpu_custom_call.1} parent=31 // pred_region
          %192 = dma.done [#allocation6], 4096
        $region40: #{tpu_custom_call.1} parent=31 // pred_fallthru
          _
        // Predicated region
        $region41: #{tpu_custom_call.1} parent=31 // pred_check
          %p193 = pneg %p84
        $region42: #{tpu_custom_call.1} parent=31 // pred_check_branch
          %195 = sbr.rel (%p193) target = $region44
        $region43: #{tpu_custom_call.1} parent=31 // pred_region
          %196 = dma.done [#allocation6], 1024
        $region44: #{tpu_custom_call.1} parent=31 // pred_fallthru
          _
        %s197 = sand.u32 %s29, 1
        %s198 = scalar_lea.sflag [#allocation3], %s197
        %s199 = sand.u32 %s29, 1
        %s200 = smul.addr %s199, 8
        %s201 = scalar_lea.vmem [#allocation2], %s200
        %p202 = pneg %p42
        %p203 = pneg %p39
        %p204 = pneg %p63
        %p205 = pneg %p60
        %p206 = pneg %p84
        %p207 = pneg %p81
        %p208 = pneg %p110
        %p209 = pneg %p107
        %s210 = sand.u32 %s97, 1
        %s211 = scalar_lea.sflag [#allocation4], %s210
        %s212 = sand.u32 %s97, 1
        %s213 = smul.addr %s212, 4
        %s214 = scalar_lea.vmem [#allocation8], %s213
        %v215 = vld [vmem:[%s184] sm:$0xff]
        %v216 = vld [vmem:[#allocation5] sm:$0xff]
        %v217 = vld [vmem:[#allocation5 + $0x8] sm:$0xff]
        %v218 = vld [vmem:[#allocation5 + $0x10] sm:$0xff]
        %v219 = vld [vmem:[#allocation5 + $0x18] sm:$0xff]
        %v220 = vlaneseq
        %v221 = vshrl.u32 %v220, 7
        %v222 = vsub.s32 0, %v221
        %v223 = vrot.slane %v215, %v222
        %v224 = vsub.f32 %v223, %v216
        %v225 = vsub.f32 %v223, %v217
        %v226 = vsub.f32 %v223, %v218
        %v227 = vsub.f32 %v223, %v219
        %v228 = vand.u32 2147483647, %v224
        %v229 = vand.u32 2147483647, %v225
        %v230 = vand.u32 2147483647, %v226
        %v231 = vand.u32 2147483647, %v227
        %v232 = vld [vmem:[#allocation5 + $0x20] sm:$0xff]
        %v233 = vld [vmem:[#allocation5 + $0x28] sm:$0xff]
        %v234 = vld [vmem:[#allocation5 + $0x30] sm:$0xff]
        %v235 = vld [vmem:[#allocation5 + $0x38] sm:$0xff]
        %v236 = vlaneseq
        %v237 = vshrl.u32 %v236, 7
        %v238 = vsub.s32 1, %v237
        %v239 = vrot.slane %v215, %v238
        %v240 = vsub.f32 %v239, %v232
        %v241 = vsub.f32 %v239, %v233
        %v242 = vsub.f32 %v239, %v234
        %v243 = vsub.f32 %v239, %v235
        %v244 = vand.u32 2147483647, %v240
        %v245 = vand.u32 2147483647, %v241
        %v246 = vand.u32 2147483647, %v242
        %v247 = vand.u32 2147483647, %v243
        %v248 = vadd.f32 %v228, %v244
        %v249 = vadd.f32 %v229, %v245
        %v250 = vadd.f32 %v230, %v246
        %v251 = vadd.f32 %v231, %v247
        %v252 = vld [vmem:[#allocation5 + $0x40] sm:$0xff]
        %v253 = vld [vmem:[#allocation5 + $0x48] sm:$0xff]
        %v254 = vld [vmem:[#allocation5 + $0x50] sm:$0xff]
        %v255 = vld [vmem:[#allocation5 + $0x58] sm:$0xff]
        %v256 = vlaneseq
        %v257 = vshrl.u32 %v256, 7
        %v258 = vsub.s32 2, %v257
        %v259 = vrot.slane %v215, %v258
        %v260 = vsub.f32 %v259, %v252
        %v261 = vsub.f32 %v259, %v253
        %v262 = vsub.f32 %v259, %v254
        %v263 = vsub.f32 %v259, %v255
        %v264 = vand.u32 2147483647, %v260
        %v265 = vand.u32 2147483647, %v261
        %v266 = vand.u32 2147483647, %v262
        %v267 = vand.u32 2147483647, %v263
        %v268 = vadd.f32 %v248, %v264
        %v269 = vadd.f32 %v249, %v265
        %v270 = vadd.f32 %v250, %v266
        %v271 = vadd.f32 %v251, %v267
        %v272 = vld [vmem:[#allocation5 + $0x60] sm:$0xff]
        %v273 = vld [vmem:[#allocation5 + $0x68] sm:$0xff]
        %v274 = vld [vmem:[#allocation5 + $0x70] sm:$0xff]
        %v275 = vld [vmem:[#allocation5 + $0x78] sm:$0xff]
        %v276 = vlaneseq
        %v277 = vshrl.u32 %v276, 7
        %v278 = vsub.s32 3, %v277
        %v279 = vrot.slane %v215, %v278
        %v280 = vsub.f32 %v279, %v272
        %v281 = vsub.f32 %v279, %v273
        %v282 = vsub.f32 %v279, %v274
        %v283 = vsub.f32 %v279, %v275
        %v284 = vand.u32 2147483647, %v280
        %v285 = vand.u32 2147483647, %v281
        %v286 = vand.u32 2147483647, %v282
        %v287 = vand.u32 2147483647, %v283
        %v288 = vadd.f32 %v268, %v284
        %v289 = vadd.f32 %v269, %v285
        %v290 = vadd.f32 %v270, %v286
        %v291 = vadd.f32 %v271, %v287
        %v292 = vld [vmem:[#allocation5 + $0x80] sm:$0xff]
        %v293 = vld [vmem:[#allocation5 + $0x88] sm:$0xff]
        %v294 = vld [vmem:[#allocation5 + $0x90] sm:$0xff]
        %v295 = vld [vmem:[#allocation5 + $0x98] sm:$0xff]
        %v296 = vlaneseq
        %v297 = vshrl.u32 %v296, 7
        %v298 = vsub.s32 4, %v297
        %v299 = vrot.slane %v215, %v298
        %v300 = vsub.f32 %v299, %v292
        %v301 = vsub.f32 %v299, %v293
        %v302 = vsub.f32 %v299, %v294
        %v303 = vsub.f32 %v299, %v295
        %v304 = vand.u32 2147483647, %v300
        %v305 = vand.u32 2147483647, %v301
        %v306 = vand.u32 2147483647, %v302
        %v307 = vand.u32 2147483647, %v303
        %v308 = vadd.f32 %v288, %v304
        %v309 = vadd.f32 %v289, %v305
        %v310 = vadd.f32 %v290, %v306
        %v311 = vadd.f32 %v291, %v307
        %v312 = vld [vmem:[#allocation5 + $0xa0] sm:$0xff]
        %v313 = vld [vmem:[#allocation5 + $0xa8] sm:$0xff]
        %v314 = vld [vmem:[#allocation5 + $0xb0] sm:$0xff]
        %v315 = vld [vmem:[#allocation5 + $0xb8] sm:$0xff]
        %v316 = vlaneseq
        %v317 = vshrl.u32 %v316, 7
        %v318 = vsub.s32 5, %v317
        %v319 = vrot.slane %v215, %v318
        %v320 = vsub.f32 %v319, %v312
        %v321 = vsub.f32 %v319, %v313
        %v322 = vsub.f32 %v319, %v314
        %v323 = vsub.f32 %v319, %v315
        %v324 = vand.u32 2147483647, %v320
        %v325 = vand.u32 2147483647, %v321
        %v326 = vand.u32 2147483647, %v322
        %v327 = vand.u32 2147483647, %v323
        %v328 = vadd.f32 %v308, %v324
        %v329 = vadd.f32 %v309, %v325
        %v330 = vadd.f32 %v310, %v326
        %v331 = vadd.f32 %v311, %v327
        %v332 = vld [vmem:[#allocation5 + $0xc0] sm:$0xff]
        %v333 = vld [vmem:[#allocation5 + $0xc8] sm:$0xff]
        %v334 = vld [vmem:[#allocation5 + $0xd0] sm:$0xff]
        %v335 = vld [vmem:[#allocation5 + $0xd8] sm:$0xff]
        %v336 = vlaneseq
        %v337 = vshrl.u32 %v336, 7
        %v338 = vsub.s32 6, %v337
        %v339 = vrot.slane %v215, %v338
        %v340 = vsub.f32 %v339, %v332
        %v341 = vsub.f32 %v339, %v333
        %v342 = vsub.f32 %v339, %v334
        %v343 = vsub.f32 %v339, %v335
        %v344 = vand.u32 2147483647, %v340
        %v345 = vand.u32 2147483647, %v341
        %v346 = vand.u32 2147483647, %v342
        %v347 = vand.u32 2147483647, %v343
        %v348 = vadd.f32 %v328, %v344
        %v349 = vadd.f32 %v329, %v345
        %v350 = vadd.f32 %v330, %v346
        %v351 = vadd.f32 %v331, %v347
        %v352 = vld [vmem:[#allocation5 + $0xe0] sm:$0xff]
        %v353 = vld [vmem:[#allocation5 + $0xe8] sm:$0xff]
        %v354 = vld [vmem:[#allocation5 + $0xf0] sm:$0xff]
        %v355 = vld [vmem:[#allocation5 + $0xf8] sm:$0xff]
        %v356 = vlaneseq
        %v357 = vshrl.u32 %v356, 7
        %v358 = vsub.s32 7, %v357
        %v359 = vrot.slane %v215, %v358
        %v360 = vsub.f32 %v359, %v352
        %v361 = vsub.f32 %v359, %v353
        %v362 = vsub.f32 %v359, %v354
        %v363 = vsub.f32 %v359, %v355
        %v364 = vand.u32 2147483647, %v360
        %v365 = vand.u32 2147483647, %v361
        %v366 = vand.u32 2147483647, %v362
        %v367 = vand.u32 2147483647, %v363
        %v368 = vadd.f32 %v348, %v364
        %v369 = vadd.f32 %v349, %v365
        %v370 = vadd.f32 %v350, %v366
        %v371 = vadd.f32 %v351, %v367
        %v372 = vmul.f32 %v368, -2.0
        %v373 = vmul.f32 %v369, -2.0
        %v374 = vmul.f32 %v370, -2.0
        %v375 = vmul.f32 %v371, -2.0
        %v376 = vmul.f32 %v372, 1.442695
        %v377 = vpow.pop %v376
        %v378 = vmul.f32 %v373, 1.442695
        %v379 = vpow.pop %v378
        %v380 = vmul.f32 %v374, 1.442695
        %v381 = vpow.pop %v380
        %v382 = vmul.f32 %v375, 1.442695
        %v383 = vpow.pop %v382
        %v384 = vmul.f32 %v377, 2.0
        %v385 = vmul.f32 %v379, 2.0
        %v386 = vmul.f32 %v381, 2.0
        %v387 = vmul.f32 %v383, 2.0
        %v388 = vld [vmem:[#allocation7] sm:$0xff]
        %v389 = vld [vmem:[#allocation7 + $0x8] sm:$0xff]
        %v390 = vld [vmem:[#allocation7 + $0x10] sm:$0xff]
        %v391 = vld [vmem:[#allocation7 + $0x18] sm:$0xff]
        %v392 = vmul.f32 %v388, %v384
        %v393 = vmul.f32 %v389, %v385
        %v394 = vmul.f32 %v390, %v386
        %v395 = vmul.f32 %v391, %v387
        %v396 = vadd.f32 %v392, %v393
        %v397 = vadd.f32 %v396, %v394
        %v398 = vadd.f32 %v397, %v395
        %v399 = vrot.slane %v398, 4
        %v400 = vadd.f32 %v398, %v399
        %v401 = vrot.slane %v400, 2
        %v402 = vadd.f32 %v400, %v401
        %v403 = vrot.slane %v402, 1
        %v404 = vadd.f32 %v402, %v403
        %v405 = vld [vmem:[#allocation7 + $0x20] sm:$0xff]
        %v406 = vld [vmem:[#allocation7 + $0x28] sm:$0xff]
        %v407 = vld [vmem:[#allocation7 + $0x30] sm:$0xff]
        %v408 = vld [vmem:[#allocation7 + $0x38] sm:$0xff]
        %v409 = vmul.f32 %v405, %v384
        %v410 = vmul.f32 %v406, %v385
        %v411 = vmul.f32 %v407, %v386
        %v412 = vmul.f32 %v408, %v387
        %v413 = vadd.f32 %v409, %v410
        %v414 = vadd.f32 %v413, %v411
        %v415 = vadd.f32 %v414, %v412
        %v416 = vrot.slane %v415, 4
        %v417 = vadd.f32 %v415, %v416
        %v418 = vrot.slane %v417, 2
        %v419 = vadd.f32 %v417, %v418
        %v420 = vrot.slane %v419, 1
        %v421 = vadd.f32 %v419, %v420
        %v422 = vsub.f32 %v421, %v404
        %v423 = vand.u32 2147483647, %v422
        %v424 = vsub.f32 0.0, %v423
        %v425 = vmul.f32 %v424, 1.442695
        %v426 = vpow.pop %v425
        %v427 = vadd.f32 %v426, 1.0
        %v428 = vrcp.pop %v427
        %v429 = vmul.f32 1.0, %v428
        %vm430 = vcmp.ge.f32.partialorder %v422, 0.0
        %v431 = vmul.f32 %v426, %v429
        %v432 = vsel %vm430, %v429, %v431
        %v433 = vsel %vm430, %v431, %v429
        %434 = vst [vmem:[%s214] sm:$0x1] %v404
        %435 = vst [vmem:[%s214 + $0x2] sm:$0x1] %v433
        %436 = vst [vmem:[%s214 + $0x1] sm:$0x1] %v421
        %437 = vst [vmem:[%s214 + $0x3] sm:$0x1] %v432
        %s438 = sand.u32 %s97, 1
        %s439 = scalar_lea.sflag [#allocation4], %s438
        %s440 = sand.u32 %s97, 1
        %s441 = smul.addr %s440, 4
        %s442 = scalar_lea.vmem [#allocation8], %s441
        // Predicated region
        $region45: #{tpu_custom_call.1} parent=31 // pred_check
          %p443 = pneg %p107
        $region46: #{tpu_custom_call.1} parent=31 // pred_check_branch
          %445 = sbr.rel (%p443) target = $region48
        $region47: #{tpu_custom_call.1} parent=31 // pred_region
          %s447 = ssub.s32 64, 64
          %448 = vsyncadd %s439, %s447
          %s449 = smul.addr %s21, 64
          %s450 = scalar_lea.hbm %s3, %s449
          %s452 = sshll.u32 %s442, 4
          %s453 = int_to_ptr.vmem [resolvable:$true] %s452
          %455 = dma.vmem_to_hbm [thread:$0]  %s453, 64, %s450, %s439
        $region48: #{tpu_custom_call.1} parent=31 // pred_fallthru
          _
      $region32: #{tpu_custom_call.1} parent=5 // pred_fallthru
        _
      %p456 = scmp.le.s32.totalorder 2, %s16
      // Predicated region
      $region49: #{tpu_custom_call.1} parent=5 // pred_check
        %p457 = pneg %p456
      $region50: #{tpu_custom_call.1} parent=5 // pred_check_branch
        %459 = sbr.rel (%p457) target = $region52
      $region51: #{tpu_custom_call.1} parent=5 // pred_region
        %s460 = ssub.s32 %s16, 2
        // Predicated region
        $region53: #{tpu_custom_call.1} parent=51 // pred_check
          %p461 = pneg %p113
        $region54: #{tpu_custom_call.1} parent=51 // pred_check_branch
          %463 = sbr.rel (%p461) target = $region56
        $region55: #{tpu_custom_call.1} parent=51 // pred_region
          %s464 = sand.u32 %s98, 1
          %s465 = scalar_lea.sflag [#allocation4], %s464
          %s466 = sand.u32 %s98, 1
          %s467 = smul.addr %s466, 4
          %s468 = scalar_lea.vmem [#allocation8], %s467
          %469 = dma.done %s465, 64
        $region56: #{tpu_custom_call.1} parent=51 // pred_fallthru
          _
      $region52: #{tpu_custom_call.1} parent=5 // pred_fallthru
        _
    $region6: #{tpu_custom_call.1} parent=1 // loop_footer
      %s20 = sadd.s32 1, %s16
    $region7: #{tpu_custom_call.1} parent=1 // loop_footer_branch
      %15 = sbr.rel target = $region3
    $region8: #{tpu_custom_call.1} parent=1 // loop_exit
      _
    %470 = vsyncpa [#allocation3], 1
    %s471 = scalar_lea.sflag [#allocation3], 1
    %472 = vsyncpa %s471, 1
    %473 = vsyncpa [#allocation6], 1
    %474 = vsyncpa [#allocation4], 1
    %s475 = scalar_lea.sflag [#allocation4], 1
    %476 = vsyncpa %s475, 1

</llo_original>
